<compile_context>
chip_gen: v6e
topology: v6e:2x2x1
jax: 0.10.0
libtpu: 0.0.40
codegen_flags: <defaults>
</compile_context>

<pallas_src>
import numpy as np
import jax
import jax.numpy as jnp
from jax.experimental import pallas as pl
from jax.experimental.pallas import tpu as pltpu

LANE = 128           # vreg lane width
PAD_PRED = -1.0e4    # padding logit -> exactly zero focal loss (with true = 0)


def _pow(base, gamma):
    """(base)**gamma with gamma known at trace time; base in [0, 1)."""
    g = float(gamma)
    if g == 0.0:
        return jnp.ones_like(base)
    if g == 0.5:
        return jnp.sqrt(base)
    if g == 1.0:
        return base
    if g == 1.5:
        return base * jnp.sqrt(base)            # EUP sqrt + VPU mul, no exp/log
    if g == 2.0:
        return base * base
    if g == 3.0:
        return base * base * base
    # General fallback: exp(g*log(base)), guarded against log(0).
    safe = jnp.maximum(base, jnp.float32(1e-38))
    return jnp.where(base > 0.0, jnp.exp(jnp.float32(g) * jnp.log(safe)), 0.0)


def _focal_elems(p, t, gamma, alpha):
    """Element-wise focal BCE-with-logits loss (f32 in, f32 out)."""
    e = jnp.exp(-jnp.abs(p))                     # exp(-|p|), computed once (EUP)
    log_term = jnp.log(1.0 + e)                  # log(1+exp(-|p|))
    bce = jnp.maximum(p, 0.0) - p * t + log_term # stable BCE-with-logits ('none')
    inv = 1.0 / (1.0 + e)
    prob = jnp.where(p >= 0.0, inv, e * inv)     # sigmoid(p) from the same exp
    one_m_t = 1.0 - t
    p_t = t * prob + one_m_t * (1.0 - prob)
    alpha_factor = t * alpha + one_m_t * (1.0 - alpha)
    base = jnp.maximum(1.0 - p_t, 0.0)           # guard fp-negative
    return bce * alpha_factor * _pow(base, gamma)


def _make_reduce_kernel(gamma, alpha, n_total, mean):
    inv_n = 1.0 / float(n_total)

    def kernel(pred_ref, true_ref, out_ref, acc_ref):
        i = pl.program_id(0)

        @pl.when(i == 0)
        def _():
            acc_ref[...] = jnp.zeros_like(acc_ref)

        p = pred_ref[...].astype(jnp.float32)
        t = true_ref[...].astype(jnp.float32)
        loss = _focal_elems(p, t, gamma, alpha)
        # Padded tail was filled with (pred=-1e4, true=0) -> loss == 0 exactly,
        # so no masking is required here.

        # Lane-wise running partial sums; collapse across lanes only once.
        acc_ref[...] += jnp.sum(loss, axis=0, keepdims=True)

        @pl.when(i == pl.num_programs(0) - 1)
        def _():
            total = jnp.sum(acc_ref[...])
            out_ref[0, 0] = total * inv_n if mean else total

    return kernel


def _make_elementwise_kernel(gamma, alpha, out_dtype):
    def kernel(pred_ref, true_ref, out_ref):
        p = pred_ref[...].astype(jnp.float32)
        t = true_ref[...].astype(jnp.float32)
        out_ref[...] = _focal_elems(p, t, gamma, alpha).astype(out_dtype)

    return kernel


def focal_loss(pred, true, gamma=1.5, alpha=0.25, reduction="mean",
               max_block_rows=2048):
    """Pallas equivalent of FocalLoss(nn.BCEWithLogitsLoss(...)).forward(pred, true)."""
    assert pred.shape == true.shape, (pred.shape, true.shape)
    orig_shape = pred.shape
    n_total = int(np.prod(orig_shape)) if orig_shape else 1

    # Lane-dense flat layout: (rows, 128), rows a multiple of 8 and of the block.
    rows = -(-n_total // LANE)                 # ceil(n / 128)
    rows = max(8, -(-rows // 8) * 8)           # round up to sublane multiple
    block_rows = min(int(max_block_rows), rows)
    block_rows = -(-block_rows // 8) * 8
    num_blocks = -(-rows // block_rows)
    rows_padded = num_blocks * block_rows
    n_padded = rows_padded * LANE

    def to_tiles(x, pad_value):
        flat = x.reshape(-1)
        if n_padded > n_total:
            flat = jnp.pad(flat, (0, n_padded - n_total),
                           constant_values=pad_value)
        return flat.reshape(rows_padded, LANE)

    in_specs = [
        pl.BlockSpec((block_rows, LANE), lambda i: (i, 0)),
        pl.BlockSpec((block_rows, LANE), lambda i: (i, 0)),
    ]

    if reduction in ("mean", "sum"):
        # Pad so the tail contributes exactly zero loss -> no in-kernel masking.
        pred2 = to_tiles(pred, PAD_PRED)
        true2 = to_tiles(true, 0)
        kernel = _make_reduce_kernel(gamma, alpha, n_total,
                                     mean=(reduction == "mean"))
        out = pl.pallas_call(
            kernel,
            out_shape=jax.ShapeDtypeStruct((1, 1), jnp.float32),
            grid_spec=pltpu.PrefetchScalarGridSpec(
                num_scalar_prefetch=0,
                grid=(num_blocks,),
                in_specs=in_specs,
                out_specs=pl.BlockSpec((1, 1), lambda i: (0, 0)),
                scratch_shapes=[pltpu.VMEM((1, LANE), jnp.float32)],
            ),
            compiler_params=pltpu.CompilerParams(
                dimension_semantics=("arbitrary",)),
        )(pred2, true2)
        return out[0, 0]

    elif reduction == "none":
        pred2 = to_tiles(pred, 0)
        true2 = to_tiles(true, 0)
        out_dtype = pred.dtype if jnp.issubdtype(pred.dtype, jnp.floating) else jnp.float32
        kernel = _make_elementwise_kernel(gamma, alpha, out_dtype)
        out = pl.pallas_call(
            kernel,
            out_shape=jax.ShapeDtypeStruct((rows_padded, LANE), out_dtype),
            grid_spec=pltpu.PrefetchScalarGridSpec(
                num_scalar_prefetch=0,
                grid=(num_blocks,),
                in_specs=in_specs,
                out_specs=pl.BlockSpec((block_rows, LANE), lambda i: (i, 0)),
            ),
            compiler_params=pltpu.CompilerParams(
                dimension_semantics=("parallel",)),
        )(pred2, true2)
        return out.reshape(-1)[:n_total].reshape(orig_shape)

    else:
        raise ValueError(f"unsupported reduction: {reduction}")


def _focal_loss_ref(pred, true, gamma=1.5, alpha=0.25):
    """Pure-JAX reference of FocalLoss(BCEWithLogitsLoss), reduction='none'."""
    p = pred.astype(jnp.float32)
    t = true.astype(jnp.float32)
    bce = jnp.maximum(p, 0.0) - p * t + jnp.log(1.0 + jnp.exp(-jnp.abs(p)))
    prob = 1.0 / (1.0 + jnp.exp(-p))
    p_t = t * prob + (1.0 - t) * (1.0 - prob)
    alpha_factor = t * alpha + (1.0 - t) * (1.0 - alpha)
    modulating = jnp.maximum(1.0 - p_t, 0.0) ** gamma
    return bce * alpha_factor * modulating


if __name__ == "__main__":
    key = jax.random.PRNGKey(0)
    kp, kt = jax.random.split(key)

    shape = (2, 4, 16, 16)  # small NCHW logits, as in YOLOv5-Lite objectness/cls heads
    pred = jax.random.normal(kp, shape, dtype=jnp.float32)
    true = (jax.random.uniform(kt, shape) > 0.5).astype(jnp.float32)

    out_none = jax.block_until_ready(focal_loss(pred, true, reduction="none"))
    out_mean = jax.block_until_ready(focal_loss(pred, true, reduction="mean"))
    out_sum = jax.block_until_ready(focal_loss(pred, true, reduction="sum"))

    ref_none = _focal_loss_ref(pred, true)
    np.testing.assert_allclose(np.asarray(out_none), np.asarray(ref_none),
                               rtol=1e-5, atol=1e-6)
    np.testing.assert_allclose(float(out_mean), float(jnp.mean(ref_none)),
                               rtol=1e-5, atol=1e-6)
    np.testing.assert_allclose(float(out_sum), float(jnp.sum(ref_none)),
                               rtol=1e-5, atol=1e-4)

    print("KERNEL_OK")
</pallas_src>

<mosaic_0001>
module attributes {stable_mosaic.version = 11 : i64} {
  func.func @kernel(%arg0: i32, %arg1: memref<16x128xf32, #tpu.memory_space<vmem>>, %arg2: memref<16x128xf32, #tpu.memory_space<vmem>>, %arg3: memref<16x128xf32, #tpu.memory_space<vmem>>) attributes {dimension_semantics = [#tpu.dimension_semantics<parallel>], iteration_bounds = array<i64: 1>, scalar_prefetch = 0 : i64, scratch_operands = 0 : i64, tpu.core_type = #tpu.core_type<tc>, window_params = [{transform_indices = @transform_0, window_bounds = array<i64: 16, 128>}, {transform_indices = @transform_1, window_bounds = array<i64: 16, 128>}, {transform_indices = @transform_2, window_bounds = array<i64: 16, 128>}]} {
    %c0 = arith.constant 0 : index
    %c0_0 = arith.constant 0 : index
    %0 = vector.load %arg1[%c0, %c0_0] : memref<16x128xf32, #tpu.memory_space<vmem>>, vector<16x128xf32>
    %c0_1 = arith.constant 0 : index
    %c0_2 = arith.constant 0 : index
    %1 = vector.load %arg2[%c0_1, %c0_2] : memref<16x128xf32, #tpu.memory_space<vmem>>, vector<16x128xf32>
    %2 = math.absf %0 : vector<16x128xf32>
    %cst = arith.constant 0.000000e+00 : f32
    %3 = vector.broadcast %cst : f32 to vector<16x128xf32>
    %4 = arith.subf %3, %2 : vector<16x128xf32>
    %5 = math.exp %4 : vector<16x128xf32>
    %cst_3 = arith.constant 1.000000e+00 : f32
    %6 = vector.broadcast %cst_3 : f32 to vector<16x128xf32>
    %7 = arith.addf %6, %5 : vector<16x128xf32>
    %8 = math.log %7 : vector<16x128xf32>
    %cst_4 = arith.constant 0.000000e+00 : f32
    %9 = vector.broadcast %cst_4 : f32 to vector<16x128xf32>
    %10 = arith.maximumf %0, %9 : vector<16x128xf32>
    %11 = arith.mulf %0, %1 : vector<16x128xf32>
    %12 = arith.subf %10, %11 : vector<16x128xf32>
    %13 = arith.addf %12, %8 : vector<16x128xf32>
    %cst_5 = arith.constant 1.000000e+00 : f32
    %14 = vector.broadcast %cst_5 : f32 to vector<16x128xf32>
    %15 = arith.addf %14, %5 : vector<16x128xf32>
    %cst_6 = arith.constant 1.000000e+00 : f32
    %16 = vector.broadcast %cst_6 : f32 to vector<16x128xf32>
    %17 = arith.divf %16, %15 : vector<16x128xf32>
    %cst_7 = arith.constant 0.000000e+00 : f32
    %18 = vector.broadcast %cst_7 : f32 to vector<16x128xf32>
    %19 = arith.cmpf oge, %0, %18 : vector<16x128xf32>
    %20 = arith.mulf %5, %17 : vector<16x128xf32>
    %21 = arith.select %19, %17, %20 : vector<16x128xi1>, vector<16x128xf32>
    %cst_8 = arith.constant 1.000000e+00 : f32
    %22 = vector.broadcast %cst_8 : f32 to vector<16x128xf32>
    %23 = arith.subf %22, %1 : vector<16x128xf32>
    %24 = arith.mulf %1, %21 : vector<16x128xf32>
    %cst_9 = arith.constant 1.000000e+00 : f32
    %25 = vector.broadcast %cst_9 : f32 to vector<16x128xf32>
    %26 = arith.subf %25, %21 : vector<16x128xf32>
    %27 = arith.mulf %23, %26 : vector<16x128xf32>
    %28 = arith.addf %24, %27 : vector<16x128xf32>
    %cst_10 = arith.constant 2.500000e-01 : f32
    %29 = vector.broadcast %cst_10 : f32 to vector<16x128xf32>
    %30 = arith.mulf %1, %29 : vector<16x128xf32>
    %cst_11 = arith.constant 7.500000e-01 : f32
    %31 = vector.broadcast %cst_11 : f32 to vector<16x128xf32>
    %32 = arith.mulf %23, %31 : vector<16x128xf32>
    %33 = arith.addf %30, %32 : vector<16x128xf32>
    %cst_12 = arith.constant 1.000000e+00 : f32
    %34 = vector.broadcast %cst_12 : f32 to vector<16x128xf32>
    %35 = arith.subf %34, %28 : vector<16x128xf32>
    %cst_13 = arith.constant 0.000000e+00 : f32
    %36 = vector.broadcast %cst_13 : f32 to vector<16x128xf32>
    %37 = arith.maximumf %35, %36 : vector<16x128xf32>
    %38 = arith.mulf %13, %33 : vector<16x128xf32>
    %39 = math.sqrt %37 : vector<16x128xf32>
    %40 = arith.mulf %37, %39 : vector<16x128xf32>
    %41 = arith.mulf %38, %40 : vector<16x128xf32>
    %c0_14 = arith.constant 0 : index
    %c0_15 = arith.constant 0 : index
    %42 = vector.load %arg3[%c0_14, %c0_15] : memref<16x128xf32, #tpu.memory_space<vmem>>, vector<16x128xf32>
    tpu.vector_store %arg3[%c0_14, %c0_15], %41 {strides = array<i32>} : memref<16x128xf32, #tpu.memory_space<vmem>>, vector<16x128xf32>,
    return
  }
  func.func @transform_0(%arg0: i32) -> (i32, i32) {
    %c0_i32 = arith.constant 0 : i32
    %c0_i32_0 = arith.constant 0 : i32
    return %arg0, %c0_i32 : i32, i32
  }
  func.func @transform_1(%arg0: i32) -> (i32, i32) {
    %c0_i32 = arith.constant 0 : i32
    %c0_i32_0 = arith.constant 0 : i32
    return %arg0, %c0_i32 : i32, i32
  }
  func.func @transform_2(%arg0: i32) -> (i32, i32) {
    %c0_i32 = arith.constant 0 : i32
    %c0_i32_0 = arith.constant 0 : i32
    return %arg0, %c0_i32 : i32, i32
  }
}

</mosaic_0001>

<llo_original>
// kernel: tpu_custom_call.1
$region0: #{tpu_custom_call.1}
  #allocation0 [shape = 'u32[]', space=smem, size = 0x4, offset = 0x4, fixed_abs, tag = 'smem constant byte address 0x4 - core index']
  #allocation1 [shape = 'u32[144,128]{1,0:T(1,128)}', space=vmem, size = 0x12000, scoped, tag = 'internal scratch']
  %s0 = inlined_call_operand.hbm [shape: f32[16,128], index: 0, kind: input, shape index: {}]
  %s1 = inlined_call_operand.hbm [shape: f32[16,128], index: 1, kind: input, shape index: {}]
  %s2 = inlined_call_operand.hbm [shape: f32[16,128], index: 2, kind: output, shape index: {}]
  %s3 = sld [smem:[#allocation0]]
  $region26: #{tpu_custom_call.1} parent=0
    _
  %s5 = ssub.s32 1, %s3
  %s6 = scalar_select 0, %s5, %s3
  $region1: #{tpu_custom_call.1} parent=0
    #allocation2 [shape = 'u8[8192]{0}', space=vmem, size = 0x2000, scoped, tag = 'input window, operand 0, single buffered']
    #allocation3 [shape = 's32[1]{0}', space=sflag, size = 0x4, scoped, tag = 'scoped memory for tpu_custom_call.1']
    #allocation4 [shape = 's32[1]{0}', space=sflag, size = 0x4, scoped, tag = 'scoped memory for tpu_custom_call.1']
    #allocation5 [shape = 'u8[8192]{0}', space=vmem, size = 0x2000, scoped, tag = 'input window, operand 1, single buffered']
    #allocation6 [shape = 's32[1]{0}', space=sflag, size = 0x4, scoped, tag = 'scoped memory for tpu_custom_call.1']
    #allocation7 [shape = 'u8[8192]{0}', space=vmem, size = 0x2000, scoped, tag = 'output window, operand 0, single buffered']
    %7 = vsyncpa [#allocation3], 0
    %8 = vsyncpa [#allocation6], 0
    %9 = vsyncpa [#allocation4], 0
    // Predicated region
    $region2: #{tpu_custom_call.1} parent=1 // pred_check
      _
    $region3: #{tpu_custom_call.1} parent=1 // pred_check_branch
      %11 = sbr.rel (0) target = $region5
    $region4: #{tpu_custom_call.1} parent=1 // pred_region
      %s13 = ssub.s32 256, 256
      %14 = vsyncadd [#allocation3], %s13
      %s15 = sshll.u32 [#allocation2], 4
      %s16 = int_to_ptr.vmem [resolvable:$true] %s15
      %21 = dma.hbm_to_vmem [thread:$0]  %s0, 256, %s16, [#allocation3], 128, 128, 8
    $region5: #{tpu_custom_call.1} parent=1 // pred_fallthru
      _
    // Predicated region
    $region6: #{tpu_custom_call.1} parent=1 // pred_check
      _
    $region7: #{tpu_custom_call.1} parent=1 // pred_check_branch
      %23 = sbr.rel (0) target = $region9
    $region8: #{tpu_custom_call.1} parent=1 // pred_region
      %s25 = ssub.s32 256, 256
      %26 = vsyncadd [#allocation6], %s25
      %s27 = sshll.u32 [#allocation5], 4
      %s28 = int_to_ptr.vmem [resolvable:$true] %s27
      %33 = dma.hbm_to_vmem [thread:$0]  %s1, 256, %s28, [#allocation6], 128, 128, 8
    $region9: #{tpu_custom_call.1} parent=1 // pred_fallthru
      _
    // Predicated region
    $region10: #{tpu_custom_call.1} parent=1 // pred_check
      _
    $region11: #{tpu_custom_call.1} parent=1 // pred_check_branch
      %35 = sbr.rel (0) target = $region13
    $region12: #{tpu_custom_call.1} parent=1 // pred_region
      %36 = dma.done [#allocation3], 256
    $region13: #{tpu_custom_call.1} parent=1 // pred_fallthru
      _
    // Predicated region
    $region14: #{tpu_custom_call.1} parent=1 // pred_check
      _
    $region15: #{tpu_custom_call.1} parent=1 // pred_check_branch
      %38 = sbr.rel (0) target = $region17
    $region16: #{tpu_custom_call.1} parent=1 // pred_region
      %39 = dma.done [#allocation6], 256
    $region17: #{tpu_custom_call.1} parent=1 // pred_fallthru
      _
    %v40 = vld [vmem:[#allocation2] sm:$0xff]
    %v41 = vld [vmem:[#allocation2 + $0x8] sm:$0xff]
    %v42 = vld [vmem:[#allocation5] sm:$0xff]
    %v43 = vld [vmem:[#allocation5 + $0x8] sm:$0xff]
    %v44 = vand.u32 2147483647, %v40
    %v45 = vand.u32 2147483647, %v41
    %v46 = vsub.f32 0.0, %v44
    %v47 = vsub.f32 0.0, %v45
    %v48 = vmul.f32 %v46, 1.442695
    %v49 = vpow.pop %v48
    %v50 = vmul.f32 %v47, 1.442695
    %v51 = vpow.pop %v50
    %v52 = vadd.f32 %v49, 1.0
    %v53 = vadd.f32 %v51, 1.0
    %v54 = vlog2.pop %v52
    %v55 = vmul.f32 %v54, 0.6931472
    %v56 = vlog2.pop %v53
    %v57 = vmul.f32 %v56, 0.6931472
    %v58 = vmax.f32 %v40, 0.0
    %v59 = vmax.f32 %v41, 0.0
    %v60 = vmul.f32 %v40, %v42
    %v61 = vmul.f32 %v41, %v43
    %v62 = vsub.f32 %v58, %v60
    %v63 = vsub.f32 %v59, %v61
    %v64 = vadd.f32 %v62, %v55
    %v65 = vadd.f32 %v63, %v57
    %v66 = vrcp.pop %v52
    %v67 = vmul.f32 1.0, %v66
    %v68 = vrcp.pop %v53
    %v69 = vmul.f32 1.0, %v68
    %vm70 = vcmp.ge.f32.partialorder %v40, 0.0
    %vm71 = vcmp.ge.f32.partialorder %v41, 0.0
    %v72 = vmul.f32 %v49, %v67
    %v73 = vmul.f32 %v51, %v69
    %v74 = vsel %vm70, %v67, %v72
    %v75 = vsel %vm71, %v69, %v73
    %v76 = vsub.f32 1.0, %v42
    %v77 = vsub.f32 1.0, %v43
    %v78 = vmul.f32 %v42, %v74
    %v79 = vmul.f32 %v43, %v75
    %v80 = vsub.f32 1.0, %v74
    %v81 = vsub.f32 1.0, %v75
    %v82 = vmul.f32 %v76, %v80
    %v83 = vmul.f32 %v77, %v81
    %v84 = vadd.f32 %v78, %v82
    %v85 = vadd.f32 %v79, %v83
    %v86 = vmul.f32 %v42, 0.25
    %v87 = vmul.f32 %v43, 0.25
    %v88 = vmul.f32 %v76, 0.75
    %v89 = vmul.f32 %v77, 0.75
    %v90 = vadd.f32 %v86, %v88
    %v91 = vadd.f32 %v87, %v89
    %v92 = vsub.f32 1.0, %v84
    %v93 = vsub.f32 1.0, %v85
    %v94 = vmax.f32 %v92, 0.0
    %v95 = vmax.f32 %v93, 0.0
    %v96 = vmul.f32 %v64, %v90
    %v97 = vmul.f32 %v65, %v91
    %v98 = vrsqrt.pop %v94
    %v99 = vmul.f32 %v94, %v98
    %vm100 = vcmp.eq.f32.partialorder %v94, inf
    %v101 = vsel %vm100, %v94, %v99
    %vm102 = vcmp.eq.f32.partialorder %v94, 0.0
    %v103 = vand.u32 %v94, 2147483648
    %v104 = vsel %vm102, %v103, %v101
    %v105 = vrsqrt.pop %v95
    %v106 = vmul.f32 %v95, %v105
    %vm107 = vcmp.eq.f32.partialorder %v95, inf
    %v108 = vsel %vm107, %v95, %v106
    %vm109 = vcmp.eq.f32.partialorder %v95, 0.0
    %v110 = vand.u32 %v95, 2147483648
    %v111 = vsel %vm109, %v110, %v108
    %v112 = vmul.f32 %v94, %v104
    %v113 = vmul.f32 %v95, %v111
    %v114 = vmul.f32 %v96, %v112
    %v115 = vmul.f32 %v97, %v113
    %116 = vst [vmem:[#allocation7] sm:$0xff] %v114
    %117 = vst [vmem:[#allocation7 + $0x8] sm:$0xff] %v115
    // Predicated region
    $region18: #{tpu_custom_call.1} parent=1 // pred_check
      _
    $region19: #{tpu_custom_call.1} parent=1 // pred_check_branch
      %119 = sbr.rel (0) target = $region21
    $region20: #{tpu_custom_call.1} parent=1 // pred_region
      %s121 = ssub.s32 256, 256
      %122 = vsyncadd [#allocation4], %s121
      %s123 = sshll.u32 [#allocation7], 4
      %s124 = int_to_ptr.vmem [resolvable:$true] %s123
      %129 = dma.vmem_to_hbm [thread:$0]  %s124, 256, %s2, [#allocation4], 128, 128, 8
    $region21: #{tpu_custom_call.1} parent=1 // pred_fallthru
      _
    // Predicated region
    $region22: #{tpu_custom_call.1} parent=1 // pred_check
      _
    $region23: #{tpu_custom_call.1} parent=1 // pred_check_branch
      %131 = sbr.rel (0) target = $region25
    $region24: #{tpu_custom_call.1} parent=1 // pred_region
      %132 = dma.done [#allocation4], 256
    $region25: #{tpu_custom_call.1} parent=1 // pred_fallthru
      _
    %133 = vsyncpa [#allocation3], 1
    %134 = vsyncpa [#allocation6], 1
    %135 = vsyncpa [#allocation4], 1

</llo_original>
